<compile_context>
chip_gen: v7x
topology: tpu7x:2x2x1
jax: 0.10.0
libtpu: 0.0.40
codegen_flags: <defaults>
</compile_context>

<pallas_src>
import functools

import jax
import jax.numpy as jnp
from jax.experimental import pallas as pl
from jax.experimental.pallas import tpu as pltpu

BN_EPS = 1e-3   # matches nn.BatchNorm1d(..., eps=0.001)
LANE = 128
SUBLANE = 8


def _round_up(x, m):
    return ((x + m - 1) // m) * m


def _cdiv(a, b):
    return (a + b - 1) // b


# ----------------------------------------------------------------------------
# Kernel: all layers fused. Activation lives in VMEM/vregs between layers.
# ----------------------------------------------------------------------------
def _make_fused_kernel(n_layers):
    def kernel(*refs):
        # refs = (x, w_0..w_{L-1}, b_0..b_{L-1}, out)
        x_ref = refs[0]
        w_refs = refs[1:1 + n_layers]
        b_refs = refs[1 + n_layers:1 + 2 * n_layers]
        o_ref = refs[1 + 2 * n_layers]

        act = x_ref[...]                                   # f32 (TB, d_in_pad0)
        for l in range(n_layers):                          # static unroll (small L)
            w = w_refs[l][...]                             # (d_in_pad_l, d_out_pad_l)
            y = jnp.dot(act.astype(w.dtype), w,            # MXU (bf16 in, f32 acc)
                        preferred_element_type=jnp.float32)
            y = y + b_refs[l][...]                         # folded Linear+BN bias (f32 VPU)
            act = jnp.maximum(y, 0.0)                      # ReLU in f32 (v5e: no bf16 VPU)
        o_ref[...] = act.astype(o_ref.dtype)               # lane-dense store (n_out_pad)
    return kernel


# ----------------------------------------------------------------------------
# Parameter prep: fold BN into Linear, transpose, zero-pad EACH layer to its own
# 128-lane rectangle, cast weights for the MXU. Done ONCE, outside the hot path.
# ----------------------------------------------------------------------------
def fold_and_pad_params(params, mxu_dtype=jnp.bfloat16):
    w_list, b_list = [], []
    for p in params:
        d_out, d_in = p["w"].shape
        d_in_p, d_out_p = _round_up(d_in, LANE), _round_up(d_out, LANE)
        scale = p["gamma"] * jax.lax.rsqrt(p["var"] + BN_EPS)
        w_f = p["w"].T * scale[None, :]                     # (d_in, d_out), BN folded
        b_f = (p["b"] - p["mean"]) * scale + p["beta"]      # (d_out,)
        w_pad = jnp.zeros((d_in_p, d_out_p), jnp.float32).at[:d_in, :d_out].set(w_f)
        b_pad = jnp.zeros((1, d_out_p), jnp.float32).at[0, :d_out].set(b_f)
        w_list.append(w_pad.astype(mxu_dtype))              # bf16: v6e/v7x MXU + half VMEM
        b_list.append(b_pad)                                 # bias kept f32
    return w_list, b_list


# ----------------------------------------------------------------------------
# Forward wrapper: batch-tiled, pipelined grid; weights resident (single-buffered).
# ----------------------------------------------------------------------------
@functools.partial(jax.jit, static_argnames=("n_out", "tb"))
def fclayers_apply(x, w_list, b_list, *, n_out, tb=512):
    """Full FCLayers forward (eval mode). Accepts (B, n_in) or (S, B, n_in)."""
    n_layers = len(w_list)
    d_in_pad = w_list[0].shape[0]
    n_out_pad = w_list[-1].shape[1]
    if not (0 < n_out <= n_out_pad and _round_up(n_out, LANE) == n_out_pad):
        raise ValueError(f"n_out={n_out} inconsistent with folded params "
                         f"(last layer padded width {n_out_pad})")

    is_3d = x.ndim == 3
    if is_3d:
        S, B0, _ = x.shape
        x = x.reshape(S * B0, x.shape[-1])   # eval BN is a per-feature affine -> exact
    B, d_in = x.shape
    if d_in > d_in_pad:
        raise ValueError(f"input width {d_in} exceeds folded first-layer width {d_in_pad}")

    # Batch tiling: TB multiple of 8 sublanes, minimal row padding, >=2 tiles when
    # possible so dimension_semantics=("parallel",) can shard across both v7x TCs.
    tb = max(SUBLANE, _round_up(tb, SUBLANE))
    n_tiles = max(_cdiv(B, tb), 2 if B >= 2 * SUBLANE else 1)
    TB = _round_up(_cdiv(B, n_tiles), SUBLANE)
    B_pad = TB * n_tiles

    # Pad only when needed (an extra HBM pass; skipped in the already-aligned case).
    x = x.astype(jnp.float32)
    if B_pad != B or d_in_pad != d_in:
        x = jnp.pad(x, ((0, B_pad - B), (0, d_in_pad - d_in)))

    # Explicit VMEM budget: resident weights/biases (+headroom as if double-buffered),
    # double-buffered activation in/out tiles, unrolled inter-layer temporaries.
    # Capped at 64 MiB = v7x physical VMEM so the config is legal on every generation.
    w_bytes = sum(w.size * w.dtype.itemsize for w in w_list)
    b_bytes = sum(b.size * b.dtype.itemsize for b in b_list)
    act_bytes = 2 * TB * d_in_pad * 4 + 2 * TB * n_out_pad * 4
    inter_bytes = 2 * TB * max(w.shape[1] for w in w_list) * 4
    vmem_limit = int(min(max(2 * (w_bytes + b_bytes) + act_bytes + inter_bytes + (4 << 20),
                             16 << 20),
                         64 << 20))

    def _resident_spec(shape):
        # Constant index_map + single buffer: weights/biases live in VMEM once, no
        # double-buffering, no per-step DMA.
        return pl.BlockSpec(shape, lambda i: (0, 0), pipeline_mode=pl.Buffered(1))

    in_specs = [pl.BlockSpec((TB, d_in_pad), lambda i: (i, 0))]       # activations (tiled)
    in_specs += [_resident_spec(w.shape) for w in w_list]             # per-layer weights
    in_specs += [_resident_spec(b.shape) for b in b_list]             # per-layer biases

    out = pl.pallas_call(
        _make_fused_kernel(n_layers),
        out_shape=jax.ShapeDtypeStruct((B_pad, n_out_pad), jnp.float32),
        grid=(n_tiles,),
        in_specs=in_specs,
        out_specs=pl.BlockSpec((TB, n_out_pad), lambda i: (i, 0)),
        compiler_params=pltpu.CompilerParams(
            dimension_semantics=("parallel",),      # v7x: shard batch tiles over both TCs
            vmem_limit_bytes=vmem_limit),
    )(x, *w_list, *b_list)

    out = out[:B, :n_out]
    if is_3d:
        out = out.reshape(S, B0, n_out)
    return out


# ----------------------------------------------------------------------------
# Synthetic parameters matching FCLayers.__init__ shapes.
# ----------------------------------------------------------------------------
def init_fclayers_params(key, n_in, n_out, n_layers=1, n_hidden=128):
    layers_dim = [n_in] + (n_layers - 1) * [n_hidden] + [n_out]
    params = []
    for d_in, d_out in zip(layers_dim[:-1], layers_dim[1:]):
        key, k_w, k_b, k_g, k_be, k_m, k_v = jax.random.split(key, 7)
        bound = 1.0 / float(d_in) ** 0.5
        w = jax.random.uniform(k_w, (d_out, d_in), jnp.float32, -bound, bound)
        b = jax.random.uniform(k_b, (d_out,), jnp.float32, -bound, bound)
        gamma = 1.0 + 0.1 * jax.random.normal(k_g, (d_out,), jnp.float32)
        beta = 0.1 * jax.random.normal(k_be, (d_out,), jnp.float32)
        rmean = 0.1 * jax.random.normal(k_m, (d_out,), jnp.float32)
        rvar = 1.0 + 0.1 * jax.random.uniform(k_v, (d_out,), jnp.float32)
        params.append(dict(w=w, b=b, gamma=gamma, beta=beta, mean=rmean, var=rvar))
    return params


def fclayers_reference(x, params):
    """Pure-JAX reference (un-folded BN, f32) for correctness check."""
    is_3d = x.ndim == 3
    if is_3d:
        S, B, D = x.shape
        x = x.reshape(S * B, D)
    for p in params:
        y = x @ p["w"].T + p["b"]
        y = (y - p["mean"]) * (p["gamma"] / jnp.sqrt(p["var"] + BN_EPS)) + p["beta"]
        x = jnp.maximum(y, 0.0)
    if is_3d:
        x = x.reshape(S, B, -1)
    return x


if __name__ == "__main__":
    # Small shapes consistent with FCLayers: n_in=32, n_hidden=64, n_out=16, 2 layers.
    n_in, n_hidden, n_out, n_layers = 32, 64, 16, 2
    batch = 8

    key = jax.random.PRNGKey(0)
    k_x, k_x3, k_p = jax.random.split(key, 3)
    x2 = jax.random.normal(k_x, (batch, n_in), dtype=jnp.float32)
    x3 = jax.random.normal(k_x3, (3, 4, n_in), dtype=jnp.float32)   # 3-D path (S, B, n_in)

    params = init_fclayers_params(k_p, n_in, n_out, n_layers=n_layers, n_hidden=n_hidden)
    ref2 = fclayers_reference(x2, params)
    ref3 = fclayers_reference(x3, params)

    # ---- f32 MXU path: exact-semantics check (tight tolerance) ----
    w32, b32 = fold_and_pad_params(params, mxu_dtype=jnp.float32)
    out2 = jax.block_until_ready(fclayers_apply(x2, w32, b32, n_out=n_out))
    out3 = jax.block_until_ready(fclayers_apply(x3, w32, b32, n_out=n_out))
    assert out2.shape == (batch, n_out), out2.shape
    assert out3.shape == (3, 4, n_out), out3.shape
    assert jnp.allclose(out2, ref2, atol=1e-4, rtol=1e-4), float(jnp.max(jnp.abs(out2 - ref2)))
    assert jnp.allclose(out3, ref3, atol=1e-4, rtol=1e-4), float(jnp.max(jnp.abs(out3 - ref3)))

    # ---- bf16 MXU path (default for v6e/v7x throughput + halved resident VMEM) ----
    wbf, bbf = fold_and_pad_params(params)  # bf16 weights
    out2b = jax.block_until_ready(fclayers_apply(x2, wbf, bbf, n_out=n_out))
    assert out2b.shape == (batch, n_out), out2b.shape
    assert jnp.allclose(out2b, ref2, atol=5e-2, rtol=5e-2), float(jnp.max(jnp.abs(out2b - ref2)))

    print("KERNEL_OK")
</pallas_src>

<mosaic_0001>
module attributes {stable_mosaic.version = 11 : i64} {
  func.func @kernel(%arg0: i32, %arg1: memref<8x128xf32, #tpu.memory_space<vmem>>, %arg2: memref<128x128xf32, #tpu.memory_space<vmem>>, %arg3: memref<128x128xf32, #tpu.memory_space<vmem>>, %arg4: memref<1x128xf32, #tpu.memory_space<vmem>>, %arg5: memref<1x128xf32, #tpu.memory_space<vmem>>, %arg6: memref<8x128xf32, #tpu.memory_space<vmem>>) attributes {dimension_semantics = [#tpu.dimension_semantics<parallel>], iteration_bounds = array<i64: 1>, scalar_prefetch = 0 : i64, scratch_operands = 0 : i64, tpu.core_type = #tpu.core_type<tc>, window_params = [{transform_indices = @transform_0, window_bounds = array<i64: 8, 128>}, {pipeline_mode = #tpu.pipeline_mode<synchronous>, transform_indices = @transform_1, window_bounds = array<i64: 128, 128>}, {pipeline_mode = #tpu.pipeline_mode<synchronous>, transform_indices = @transform_2, window_bounds = array<i64: 128, 128>}, {pipeline_mode = #tpu.pipeline_mode<synchronous>, transform_indices = @transform_3, window_bounds = array<i64: 1, 128>}, {pipeline_mode = #tpu.pipeline_mode<synchronous>, transform_indices = @transform_4, window_bounds = array<i64: 1, 128>}, {transform_indices = @transform_5, window_bounds = array<i64: 8, 128>}]} {
    %c0 = arith.constant 0 : index
    %c0_0 = arith.constant 0 : index
    %0 = vector.load %arg1[%c0, %c0_0] : memref<8x128xf32, #tpu.memory_space<vmem>>, vector<8x128xf32>
    %c0_1 = arith.constant 0 : index
    %c0_2 = arith.constant 0 : index
    %1 = vector.load %arg2[%c0_1, %c0_2] : memref<128x128xf32, #tpu.memory_space<vmem>>, vector<128x128xf32>
    %cst = arith.constant dense<0.000000e+00> : vector<8x128xf32>
    %2 = tpu.matmul %0, %1, %cst {dimension_numbers = #tpu.dot_dimension_numbers<[1], [0], [0], [1], [0, 0, 1, 1], [], []>} : vector<8x128xf32>, vector<128x128xf32>, vector<8x128xf32> -> vector<8x128xf32>
    %c0_3 = arith.constant 0 : index
    %c0_4 = arith.constant 0 : index
    %3 = vector.load %arg4[%c0_3, %c0_4] : memref<1x128xf32, #tpu.memory_space<vmem>>, vector<1x128xf32>
    %4 = vector.broadcast %3 : vector<1x128xf32> to vector<8x128xf32>
    %5 = arith.addf %2, %4 : vector<8x128xf32>
    %cst_5 = arith.constant 0.000000e+00 : f32
    %6 = vector.broadcast %cst_5 : f32 to vector<8x128xf32>
    %7 = arith.maximumf %5, %6 : vector<8x128xf32>
    %c0_6 = arith.constant 0 : index
    %c0_7 = arith.constant 0 : index
    %8 = vector.load %arg3[%c0_6, %c0_7] : memref<128x128xf32, #tpu.memory_space<vmem>>, vector<128x128xf32>
    %cst_8 = arith.constant dense<0.000000e+00> : vector<8x128xf32>
    %9 = tpu.matmul %7, %8, %cst_8 {dimension_numbers = #tpu.dot_dimension_numbers<[1], [0], [0], [1], [0, 0, 1, 1], [], []>} : vector<8x128xf32>, vector<128x128xf32>, vector<8x128xf32> -> vector<8x128xf32>
    %c0_9 = arith.constant 0 : index
    %c0_10 = arith.constant 0 : index
    %10 = vector.load %arg5[%c0_9, %c0_10] : memref<1x128xf32, #tpu.memory_space<vmem>>, vector<1x128xf32>
    %11 = vector.broadcast %10 : vector<1x128xf32> to vector<8x128xf32>
    %12 = arith.addf %9, %11 : vector<8x128xf32>
    %cst_11 = arith.constant 0.000000e+00 : f32
    %13 = vector.broadcast %cst_11 : f32 to vector<8x128xf32>
    %14 = arith.maximumf %12, %13 : vector<8x128xf32>
    %c0_12 = arith.constant 0 : index
    %c0_13 = arith.constant 0 : index
    %15 = vector.load %arg6[%c0_12, %c0_13] : memref<8x128xf32, #tpu.memory_space<vmem>>, vector<8x128xf32>
    tpu.vector_store %arg6[%c0_12, %c0_13], %14 {strides = array<i32>} : memref<8x128xf32, #tpu.memory_space<vmem>>, vector<8x128xf32>,
    return
  }
  func.func @transform_0(%arg0: i32) -> (i32, i32) {
    %c0_i32 = arith.constant 0 : i32
    %c0_i32_0 = arith.constant 0 : i32
    return %arg0, %c0_i32 : i32, i32
  }
  func.func @transform_1(%arg0: i32) -> (i32, i32) {
    %c0_i32 = arith.constant 0 : i32
    %c0_i32_0 = arith.constant 0 : i32
    %c0_i32_1 = arith.constant 0 : i32
    return %c0_i32, %c0_i32_0 : i32, i32
  }
  func.func @transform_2(%arg0: i32) -> (i32, i32) {
    %c0_i32 = arith.constant 0 : i32
    %c0_i32_0 = arith.constant 0 : i32
    %c0_i32_1 = arith.constant 0 : i32
    return %c0_i32, %c0_i32_0 : i32, i32
  }
  func.func @transform_3(%arg0: i32) -> (i32, i32) {
    %c0_i32 = arith.constant 0 : i32
    %c0_i32_0 = arith.constant 0 : i32
    %c0_i32_1 = arith.constant 0 : i32
    return %c0_i32, %c0_i32_0 : i32, i32
  }
  func.func @transform_4(%arg0: i32) -> (i32, i32) {
    %c0_i32 = arith.constant 0 : i32
    %c0_i32_0 = arith.constant 0 : i32
    %c0_i32_1 = arith.constant 0 : i32
    return %c0_i32, %c0_i32_0 : i32, i32
  }
  func.func @transform_5(%arg0: i32) -> (i32, i32) {
    %c0_i32 = arith.constant 0 : i32
    %c0_i32_0 = arith.constant 0 : i32
    return %arg0, %c0_i32 : i32, i32
  }
}

</mosaic_0001>

<llo_original>
// kernel: fclayers_apply.1
$region0: #{fclayers_apply.1}
  #allocation0 [shape = 'u32[]', space=smem, size = 0x4, offset = 0x4, fixed_abs, tag = 'smem constant byte address 0x4 - core index']
  #allocation1 [shape = 'u32[144,128]{1,0:T(1,128)}', space=vmem, size = 0x12000, scoped, tag = 'internal scratch']
  %s0 = inlined_call_operand.vmem [shape: f32[8,128], index: 0, kind: input, shape index: {}]
  %s1 = inlined_call_operand.hbm [shape: f32[128,128], index: 1, kind: input, shape index: {}]
  %s2 = inlined_call_operand.hbm [shape: f32[128,128], index: 2, kind: input, shape index: {}]
  %s3 = inlined_call_operand.vmem [shape: f32[1,128], index: 3, kind: input, shape index: {}]
  %s4 = inlined_call_operand.vmem [shape: f32[1,128], index: 4, kind: input, shape index: {}]
  %s5 = inlined_call_operand.hbm [shape: f32[8,128], index: 5, kind: output, shape index: {}]
  %s6 = sld [smem:[#allocation0]]
  $region38: #{fclayers_apply.1} parent=0
    _
  %s8 = ssub.s32 1, %s6
  %s9 = scalar_select 0, %s8, %s6
  $region1: #{fclayers_apply.1} parent=0
    #allocation2 [shape = 'u8[65536]{0}', space=vmem, size = 0x10000, scoped, tag = 'input window, operand 1, single buffered']
    #allocation3 [shape = 's32[1]{0}', space=sflag, size = 0x4, scoped, tag = 'scoped memory for fclayers_apply.1']
    #allocation4 [shape = 's32[1]{0}', space=sflag, size = 0x4, scoped, tag = 'scoped memory for fclayers_apply.1']
    #allocation5 [shape = 'u8[65536]{0}', space=vmem, size = 0x10000, scoped, tag = 'input window, operand 2, single buffered']
    #allocation6 [shape = 's32[1]{0}', space=sflag, size = 0x4, scoped, tag = 'scoped memory for fclayers_apply.1']
    #allocation7 [shape = 'u8[4096]{0}', space=vmem, size = 0x1000, scoped, tag = 'output window, operand 0, single buffered']
    %10 = vsyncpa [#allocation3], 0
    %11 = vsyncpa [#allocation6], 0
    %12 = vsyncpa [#allocation4], 0
    // Predicated region
    $region2: #{fclayers_apply.1} parent=1 // pred_check
      _
    $region3: #{fclayers_apply.1} parent=1 // pred_check_branch
      %14 = sbr.rel (0) target = $region5
    $region4: #{fclayers_apply.1} parent=1 // pred_region
      _
    $region5: #{fclayers_apply.1} parent=1 // pred_fallthru
      _
    // Predicated region
    $region6: #{fclayers_apply.1} parent=1 // pred_check
      _
    $region7: #{fclayers_apply.1} parent=1 // pred_check_branch
      %16 = sbr.rel (0) target = $region9
    $region8: #{fclayers_apply.1} parent=1 // pred_region
      %s18 = ssub.s32 2048, 2048
      %19 = vsyncadd [#allocation3], %s18
      %s20 = sshll.u32 [#allocation2], 4
      %s21 = int_to_ptr.vmem [resolvable:$true] %s20
      %26 = dma.hbm_to_vmem [thread:$0]  %s1, 2048, %s21, [#allocation3], 128, 128, 8
    $region9: #{fclayers_apply.1} parent=1 // pred_fallthru
      _
    // Predicated region
    $region10: #{fclayers_apply.1} parent=1 // pred_check
      _
    $region11: #{fclayers_apply.1} parent=1 // pred_check_branch
      %28 = sbr.rel (0) target = $region13
    $region12: #{fclayers_apply.1} parent=1 // pred_region
      %s30 = ssub.s32 2048, 2048
      %31 = vsyncadd [#allocation6], %s30
      %s32 = sshll.u32 [#allocation5], 4
      %s33 = int_to_ptr.vmem [resolvable:$true] %s32
      %38 = dma.hbm_to_vmem [thread:$0]  %s2, 2048, %s33, [#allocation6], 128, 128, 8
    $region13: #{fclayers_apply.1} parent=1 // pred_fallthru
      _
    // Predicated region
    $region14: #{fclayers_apply.1} parent=1 // pred_check
      _
    $region15: #{fclayers_apply.1} parent=1 // pred_check_branch
      %40 = sbr.rel (0) target = $region17
    $region16: #{fclayers_apply.1} parent=1 // pred_region
      _
    $region17: #{fclayers_apply.1} parent=1 // pred_fallthru
      _
    // Predicated region
    $region18: #{fclayers_apply.1} parent=1 // pred_check
      _
    $region19: #{fclayers_apply.1} parent=1 // pred_check_branch
      %42 = sbr.rel (0) target = $region21
    $region20: #{fclayers_apply.1} parent=1 // pred_region
      _
    $region21: #{fclayers_apply.1} parent=1 // pred_fallthru
      _
    // Predicated region
    $region22: #{fclayers_apply.1} parent=1 // pred_check
      _
    $region23: #{fclayers_apply.1} parent=1 // pred_check_branch
      %44 = sbr.rel (0) target = $region25
    $region24: #{fclayers_apply.1} parent=1 // pred_region
      %45 = dma.done [#allocation3], 2048
    $region25: #{fclayers_apply.1} parent=1 // pred_fallthru
      _
    // Predicated region
    $region26: #{fclayers_apply.1} parent=1 // pred_check
      _
    $region27: #{fclayers_apply.1} parent=1 // pred_check_branch
      %47 = sbr.rel (0) target = $region29
    $region28: #{fclayers_apply.1} parent=1 // pred_region
      %48 = dma.done [#allocation6], 2048
    $region29: #{fclayers_apply.1} parent=1 // pred_fallthru
      _
    %v49 = vld [vmem:[%s0] sm:$0xff]
    %v50 = vld [vmem:[#allocation2] sm:$0xff]
    %v51 = vld [vmem:[#allocation2 + $0x8] sm:$0xff]
    %v52 = vld [vmem:[#allocation2 + $0x10] sm:$0xff]
    %v53 = vld [vmem:[#allocation2 + $0x18] sm:$0xff]
    %v54 = vld [vmem:[#allocation2 + $0x20] sm:$0xff]
    %v55 = vld [vmem:[#allocation2 + $0x28] sm:$0xff]
    %v56 = vld [vmem:[#allocation2 + $0x30] sm:$0xff]
    %v57 = vld [vmem:[#allocation2 + $0x38] sm:$0xff]
    %v58 = vld [vmem:[#allocation2 + $0x40] sm:$0xff]
    %v59 = vld [vmem:[#allocation2 + $0x48] sm:$0xff]
    %v60 = vld [vmem:[#allocation2 + $0x50] sm:$0xff]
    %v61 = vld [vmem:[#allocation2 + $0x58] sm:$0xff]
    %v62 = vld [vmem:[#allocation2 + $0x60] sm:$0xff]
    %v63 = vld [vmem:[#allocation2 + $0x68] sm:$0xff]
    %v64 = vld [vmem:[#allocation2 + $0x70] sm:$0xff]
    %v65 = vld [vmem:[#allocation2 + $0x78] sm:$0xff]
    %v66 = vld [vmem:[%s3] sm:$0x1]
    %v68 = vlaneseq
    %v69 = vshrl.u32 %v68, 7
    %v70 = vsub.s32 0, %v69
    %v71 = vrot.slane %v66, %v70
    %73 = vmatprep.subr.mxu0 0.0
    %74 = vmatpush1.msra.mxu0 %v50
    %75 = vmatprep.subr.mxu0 0.0
    %76 = vmatpush1.msra.mxu0 %v51
    %77 = vmatprep.subr.mxu0 0.0
    %78 = vmatpush1.msra.mxu0 %v52
    %79 = vmatprep.subr.mxu0 0.0
    %80 = vmatpush1.msra.mxu0 %v53
    %81 = vmatprep.subr.mxu0 0.0
    %82 = vmatpush1.msra.mxu0 %v54
    %83 = vmatprep.subr.mxu0 0.0
    %84 = vmatpush1.msra.mxu0 %v55
    %85 = vmatprep.subr.mxu0 0.0
    %86 = vmatpush1.msra.mxu0 %v56
    %87 = vmatprep.subr.mxu0 0.0
    %88 = vmatpush1.msra.mxu0 %v57
    %89 = vmatprep.subr.mxu0 0.0
    %90 = vmatpush1.msra.mxu0 %v58
    %91 = vmatprep.subr.mxu0 0.0
    %92 = vmatpush1.msra.mxu0 %v59
    %93 = vmatprep.subr.mxu0 0.0
    %94 = vmatpush1.msra.mxu0 %v60
    %95 = vmatprep.subr.mxu0 0.0
    %96 = vmatpush1.msra.mxu0 %v61
    %97 = vmatprep.subr.mxu0 0.0
    %98 = vmatpush1.msra.mxu0 %v62
    %99 = vmatprep.subr.mxu0 0.0
    %100 = vmatpush1.msra.mxu0 %v63
    %101 = vmatprep.subr.mxu0 0.0
    %102 = vmatpush1.msra.mxu0 %v64
    %103 = vmatprep.subr.mxu0 0.0
    %104 = vmatpush1.msra.mxu0 %v65
    %105 = vmatprep.subr.mxu0 0.0
    %106 = vmatpush1.msra.mxu0 0.0
    %107 = vmatprep.subr.mxu0 0.0
    %108 = vmatpush1.msra.mxu0 0.0
    %109 = vmatprep.subr.mxu0 0.0
    %110 = vmatpush1.msra.mxu0 0.0
    %111 = vmatprep.subr.mxu0 0.0
    %112 = vmatpush1.msra.mxu0 0.0
    %113 = vmatprep.subr.mxu0 0.0
    %114 = vmatpush1.msra.mxu0 0.0
    %115 = vmatprep.subr.mxu0 0.0
    %116 = vmatpush1.msra.mxu0 0.0
    %117 = vmatprep.subr.mxu0 0.0
    %118 = vmatpush1.msra.mxu0 0.0
    %119 = vmatprep.subr.mxu0 0.0
    %120 = vmatpush1.msra.mxu0 0.0
    %121 = vmatprep.subr.mxu0 0.0
    %122 = vmatpush1.msra.mxu0 0.0
    %123 = vmatprep.subr.mxu0 0.0
    %124 = vmatpush1.msra.mxu0 0.0
    %125 = vmatprep.subr.mxu0 0.0
    %126 = vmatpush1.msra.mxu0 0.0
    %127 = vmatprep.subr.mxu0 0.0
    %128 = vmatpush1.msra.mxu0 0.0
    %129 = vmatprep.subr.mxu0 0.0
    %130 = vmatpush1.msra.mxu0 0.0
    %131 = vmatprep.subr.mxu0 0.0
    %132 = vmatpush1.msra.mxu0 0.0
    %133 = vmatprep.subr.mxu0 0.0
    %134 = vmatpush1.msra.mxu0 0.0
    %135 = vmatprep.subr.mxu0 0.0
    %136 = vmatpush1.msra.mxu0 0.0
    %137 = vmatprep.mubr.f32.mxu0 0.0
    %138 = vmatmul.mubr.f32.gmra.mrb[0].mxu0 %v49
    %v139 = vpop.f32.mrb[0].mxu0
    %v140 = vadd.f32 %v71, %v139
    %v141 = vpop.f32.mrb[0].mxu0
    %142 = vdwg.mxu0
    %v143 = vmax.f32 %v140, 0.0
    %v144 = vld [vmem:[#allocation5] sm:$0xff]
    %v145 = vld [vmem:[#allocation5 + $0x8] sm:$0xff]
    %v146 = vld [vmem:[#allocation5 + $0x10] sm:$0xff]
    %v147 = vld [vmem:[#allocation5 + $0x18] sm:$0xff]
    %v148 = vld [vmem:[#allocation5 + $0x20] sm:$0xff]
    %v149 = vld [vmem:[#allocation5 + $0x28] sm:$0xff]
    %v150 = vld [vmem:[#allocation5 + $0x30] sm:$0xff]
    %v151 = vld [vmem:[#allocation5 + $0x38] sm:$0xff]
    %v152 = vld [vmem:[#allocation5 + $0x40] sm:$0xff]
    %v153 = vld [vmem:[#allocation5 + $0x48] sm:$0xff]
    %v154 = vld [vmem:[#allocation5 + $0x50] sm:$0xff]
    %v155 = vld [vmem:[#allocation5 + $0x58] sm:$0xff]
    %v156 = vld [vmem:[#allocation5 + $0x60] sm:$0xff]
    %v157 = vld [vmem:[#allocation5 + $0x68] sm:$0xff]
    %v158 = vld [vmem:[#allocation5 + $0x70] sm:$0xff]
    %v159 = vld [vmem:[#allocation5 + $0x78] sm:$0xff]
    %v160 = vld [vmem:[%s4] sm:$0x1]
    %v162 = vlaneseq
    %v163 = vshrl.u32 %v162, 7
    %v164 = vsub.s32 0, %v163
    %v165 = vrot.slane %v160, %v164
    %167 = vmatprep.subr.mxu0 0.0
    %168 = vmatpush1.msra.mxu0 %v144
    %169 = vmatprep.subr.mxu0 0.0
    %170 = vmatpush1.msra.mxu0 %v145
    %171 = vmatprep.subr.mxu0 0.0
    %172 = vmatpush1.msra.mxu0 %v146
    %173 = vmatprep.subr.mxu0 0.0
    %174 = vmatpush1.msra.mxu0 %v147
    %175 = vmatprep.subr.mxu0 0.0
    %176 = vmatpush1.msra.mxu0 %v148
    %177 = vmatprep.subr.mxu0 0.0
    %178 = vmatpush1.msra.mxu0 %v149
    %179 = vmatprep.subr.mxu0 0.0
    %180 = vmatpush1.msra.mxu0 %v150
    %181 = vmatprep.subr.mxu0 0.0
    %182 = vmatpush1.msra.mxu0 %v151
    %183 = vmatprep.subr.mxu0 0.0
    %184 = vmatpush1.msra.mxu0 %v152
    %185 = vmatprep.subr.mxu0 0.0
    %186 = vmatpush1.msra.mxu0 %v153
    %187 = vmatprep.subr.mxu0 0.0
    %188 = vmatpush1.msra.mxu0 %v154
    %189 = vmatprep.subr.mxu0 0.0
    %190 = vmatpush1.msra.mxu0 %v155
    %191 = vmatprep.subr.mxu0 0.0
    %192 = vmatpush1.msra.mxu0 %v156
    %193 = vmatprep.subr.mxu0 0.0
    %194 = vmatpush1.msra.mxu0 %v157
    %195 = vmatprep.subr.mxu0 0.0
    %196 = vmatpush1.msra.mxu0 %v158
    %197 = vmatprep.subr.mxu0 0.0
    %198 = vmatpush1.msra.mxu0 %v159
    %199 = vmatprep.subr.mxu0 0.0
    %200 = vmatpush1.msra.mxu0 0.0
    %201 = vmatprep.subr.mxu0 0.0
    %202 = vmatpush1.msra.mxu0 0.0
    %203 = vmatprep.subr.mxu0 0.0
    %204 = vmatpush1.msra.mxu0 0.0
    %205 = vmatprep.subr.mxu0 0.0
    %206 = vmatpush1.msra.mxu0 0.0
    %207 = vmatprep.subr.mxu0 0.0
    %208 = vmatpush1.msra.mxu0 0.0
    %209 = vmatprep.subr.mxu0 0.0
    %210 = vmatpush1.msra.mxu0 0.0
    %211 = vmatprep.subr.mxu0 0.0
    %212 = vmatpush1.msra.mxu0 0.0
    %213 = vmatprep.subr.mxu0 0.0
    %214 = vmatpush1.msra.mxu0 0.0
    %215 = vmatprep.subr.mxu0 0.0
    %216 = vmatpush1.msra.mxu0 0.0
    %217 = vmatprep.subr.mxu0 0.0
    %218 = vmatpush1.msra.mxu0 0.0
    %219 = vmatprep.subr.mxu0 0.0
    %220 = vmatpush1.msra.mxu0 0.0
    %221 = vmatprep.subr.mxu0 0.0
    %222 = vmatpush1.msra.mxu0 0.0
    %223 = vmatprep.subr.mxu0 0.0
    %224 = vmatpush1.msra.mxu0 0.0
    %225 = vmatprep.subr.mxu0 0.0
    %226 = vmatpush1.msra.mxu0 0.0
    %227 = vmatprep.subr.mxu0 0.0
    %228 = vmatpush1.msra.mxu0 0.0
    %229 = vmatprep.subr.mxu0 0.0
    %230 = vmatpush1.msra.mxu0 0.0
    %231 = vmatprep.mubr.f32.mxu0 0.0
    %232 = vmatmul.mubr.f32.gmra.mrb[0].mxu0 %v143
    %v233 = vpop.f32.mrb[0].mxu0
    %v234 = vadd.f32 %v165, %v233
    %v235 = vpop.f32.mrb[0].mxu0
    %236 = vdwg.mxu0
    %v237 = vmax.f32 %v234, 0.0
    %238 = vst [vmem:[#allocation7] sm:$0xff] %v237
    // Predicated region
    $region30: #{fclayers_apply.1} parent=1 // pred_check
      _
    $region31: #{fclayers_apply.1} parent=1 // pred_check_branch
      %240 = sbr.rel (0) target = $region33
    $region32: #{fclayers_apply.1} parent=1 // pred_region
      %s242 = ssub.s32 128, 128
      %243 = vsyncadd [#allocation4], %s242
      %s245 = sshll.u32 [#allocation7], 4
      %s246 = int_to_ptr.vmem [resolvable:$true] %s245
      %248 = dma.vmem_to_hbm [thread:$0]  %s246, 128, %s5, [#allocation4]
    $region33: #{fclayers_apply.1} parent=1 // pred_fallthru
      _
    // Predicated region
    $region34: #{fclayers_apply.1} parent=1 // pred_check
      _
    $region35: #{fclayers_apply.1} parent=1 // pred_check_branch
      %250 = sbr.rel (0) target = $region37
    $region36: #{fclayers_apply.1} parent=1 // pred_region
      %251 = dma.done [#allocation4], 128
    $region37: #{fclayers_apply.1} parent=1 // pred_fallthru
      _
    %252 = vsyncpa [#allocation3], 1
    %253 = vsyncpa [#allocation6], 1
    %254 = vsyncpa [#allocation4], 1

</llo_original>
